<compile_context>
chip_gen: v5e
topology: v5e:2x2
jax: 0.10.0
libtpu: 0.0.40
codegen_flags: <defaults>
</compile_context>

<pallas_src>
import functools

import jax
import jax.numpy as jnp
from jax.experimental import pallas as pl
from jax.experimental.pallas import tpu as pltpu


def _ceil_to(x, m):
    return (x + m - 1) // m * m


def _pick_tiles():
    """Generation-aware tile / VMEM-limit defaults (conservative fallback)."""
    try:
        vmem = getattr(pltpu.get_tpu_info(), "vmem_capacity_bytes", 64 * 1024 * 1024)
    except Exception:  # no TPU info available at trace time -> be conservative
        vmem = 64 * 1024 * 1024
    if vmem >= 100 * 1024 * 1024:      # v5e / v6e class (128 MiB VMEM): big tiles
        return 1024, 512, 96 * 1024 * 1024
    return 512, 512, 48 * 1024 * 1024  # v7x class (64 MiB VMEM): smaller tiles, headroom


def _matmul_bias_kernel(x_ref, w_ref, b_ref, o_ref, acc_ref):
    # x_ref: (TM, TK) compute_dtype   im2col rows for this M tile / K tile
    # w_ref: (TK, Co_p) compute_dtype flattened conv weights
    # b_ref: (1, Co_p) f32            bias (lane-padded)
    # o_ref: (TM, Co_p) out_dtype     lane-dense output tile
    # acc_ref: (TM, Co_p) f32         VMEM accumulator (resident across the K axis)
    @pl.when(pl.program_id(1) == 0)
    def _():
        acc_ref[...] = jnp.zeros_like(acc_ref)

    acc_ref[...] += jnp.dot(x_ref[...], w_ref[...],
                            preferred_element_type=jnp.float32)

    @pl.when(pl.program_id(1) == pl.num_programs(1) - 1)
    def _():
        o_ref[...] = (acc_ref[...] + b_ref[...]).astype(o_ref.dtype)


def conv3d_same(x_ncdhw, w_oidhw, bias, *, compute_dtype=jnp.bfloat16,
                m_tile=None, k_tile=None, vmem_limit_bytes=None):
    """Equivalent of torch.nn.functional.conv3d(x, w, b, stride=1, padding='same')."""
    N, C_in, D, H, W = x_ncdhw.shape
    C_out, C_in_w, kD, kH, kW = w_oidhw.shape
    assert C_in == C_in_w
    assert kD % 2 == 1 and kH % 2 == 1 and kW % 2 == 1, "odd kernel sizes for 'same'"
    out_dtype = x_ncdhw.dtype

    auto_m, auto_k, auto_v = _pick_tiles()
    m_tile = m_tile or auto_m
    k_tile = k_tile or auto_k
    vmem_limit_bytes = vmem_limit_bytes or auto_v
    assert m_tile % 8 == 0 and k_tile % 128 == 0

    pd, ph, pw = (kD - 1) // 2, (kH - 1) // 2, (kW - 1) // 2
    K = kD * kH * kW * C_in
    M_total = N * D * H * W

    # ---- wrapper-side layout work (pure XLA) -------------------------------------
    # NCDHW -> NDHWC, cast to the MXU feed dtype, zero-pad spatial dims for 'same'.
    x = jnp.transpose(x_ncdhw, (0, 2, 3, 4, 1)).astype(compute_dtype)
    x = jnp.pad(x, ((0, 0), (pd, pd), (ph, ph), (pw, pw), (0, 0)))

    # Full im2col over (kd, kh, kw, ci):
    #   X[n*D*H*W + ..., ((kd*kH+kh)*kW+kw)*C_in + ci] = x_pad[n, d+kd, h+kh, w+kw, ci]
    cols = []
    for kd in range(kD):
        for kh in range(kH):
            for kw_ in range(kW):
                cols.append(x[:, kd:kd + D, kh:kh + H, kw_:kw_ + W, :])
    x_col = jnp.stack(cols, axis=4).reshape(M_total, K)

    # ---- tiling / padding to aligned (8,128) blocks -------------------------------
    Co_p = _ceil_to(C_out, 128)                      # lane-dense, unmasked output stores
    K128 = _ceil_to(K, 128)
    TK = K128 if K128 <= k_tile else k_tile
    K_pad = _ceil_to(K, TK)
    TM = min(m_tile, _ceil_to(M_total, 8))
    M_pad = _ceil_to(M_total, TM)

    x_col = jnp.pad(x_col, ((0, M_pad - M_total), (0, K_pad - K)))

    # Weights OIDHW -> (K, Co_p) with the same (kd, kh, kw, ci) flattening; lane-pad C_out.
    wt = jnp.transpose(w_oidhw, (2, 3, 4, 1, 0)).reshape(K, C_out)
    wt = jnp.pad(wt, ((0, K_pad - K), (0, Co_p - C_out))).astype(compute_dtype)
    b = jnp.pad(bias.astype(jnp.float32), (0, Co_p - C_out)).reshape(1, Co_p)

    grid = (M_pad // TM, K_pad // TK)

    out = pl.pallas_call(
        _matmul_bias_kernel,
        out_shape=jax.ShapeDtypeStruct((M_pad, Co_p), out_dtype),
        grid_spec=pltpu.PrefetchScalarGridSpec(
            num_scalar_prefetch=0,
            grid=grid,
            in_specs=[
                pl.BlockSpec((TM, TK), lambda i, k: (i, k)),       # im2col rows
                pl.BlockSpec((TK, Co_p), lambda i, k: (k, 0)),     # weights
                pl.BlockSpec((1, Co_p), lambda i, k: (0, 0)),      # bias (grid-invariant)
            ],
            out_specs=pl.BlockSpec((TM, Co_p), lambda i, k: (i, 0)),
            scratch_shapes=[pltpu.VMEM((TM, Co_p), jnp.float32)],
        ),
        compiler_params=pltpu.CompilerParams(
            dimension_semantics=("parallel", "arbitrary"),
            vmem_limit_bytes=vmem_limit_bytes),
    )(x_col, wt, b)

    # Strip row / lane padding, unpack spatial dims, back to NCDHW.
    out = out[:M_total, :C_out].reshape(N, D, H, W, C_out)
    return jnp.transpose(out, (0, 4, 1, 2, 3))


if __name__ == "__main__":
    key = jax.random.PRNGKey(0)
    k1, k2, k3 = jax.random.split(key, 3)

    # Small shapes consistent with the module: NCDHW input, OIDHW kernel, (C_out,) bias.
    N, C_in, D, H, W = 2, 4, 8, 8, 8
    C_out, kD, kH, kW = 8, 3, 3, 3

    x = jax.random.normal(k1, (N, C_in, D, H, W), dtype=jnp.float32)
    kernel_w = 0.1 * jax.random.normal(k2, (C_out, C_in, kD, kH, kW), dtype=jnp.float32)
    bias = jax.random.normal(k3, (C_out,), dtype=jnp.float32)

    # Pure-JAX reference of torch.nn.functional.conv3d(..., stride=1, padding='same').
    ref = jax.lax.conv_general_dilated(
        x, kernel_w, window_strides=(1, 1, 1), padding="SAME",
        dimension_numbers=("NCDHW", "OIDHW", "NCDHW"))
    ref = ref + bias.reshape(1, C_out, 1, 1, 1)

    # f32 MXU-feed path: tight check of the kernel logic.
    out_f32 = jax.block_until_ready(
        jax.jit(functools.partial(conv3d_same, compute_dtype=jnp.float32))(
            x, kernel_w, bias))
    assert out_f32.shape == ref.shape == (N, C_out, D, H, W)
    err_f32 = float(jnp.max(jnp.abs(out_f32 - ref)))
    assert jnp.allclose(out_f32, ref, atol=1e-3, rtol=1e-3), err_f32

    # Default bf16 MXU-feed path: loose tolerance for bf16 operand rounding (intentional).
    out_bf16 = jax.block_until_ready(jax.jit(conv3d_same)(x, kernel_w, bias))
    err_bf16 = float(jnp.max(jnp.abs(out_bf16 - ref)))
    assert jnp.allclose(out_bf16, ref, atol=5e-2, rtol=5e-2), err_bf16

    print("KERNEL_OK")
</pallas_src>

<mosaic_0001>
module attributes {stable_mosaic.version = 11 : i64} {
  func.func @_matmul_bias_kernel(%arg0: i32, %arg1: i32, %arg2: memref<512x128xf32, #tpu.memory_space<vmem>>, %arg3: memref<128x128xf32, #tpu.memory_space<vmem>>, %arg4: memref<1x128xf32, #tpu.memory_space<vmem>>, %arg5: memref<512x128xf32, #tpu.memory_space<vmem>>, %arg6: memref<512x128xf32, #tpu.memory_space<vmem>>) attributes {dimension_semantics = [#tpu.dimension_semantics<parallel>, #tpu.dimension_semantics<arbitrary>], iteration_bounds = array<i64: 2, 1>, scalar_prefetch = 0 : i64, scratch_operands = 1 : i64, tpu.core_type = #tpu.core_type<tc>, window_params = [{transform_indices = @transform_0, window_bounds = array<i64: 512, 128>}, {transform_indices = @transform_1, window_bounds = array<i64: 128, 128>}, {pipeline_mode = #tpu.pipeline_mode<synchronous>, transform_indices = @transform_2, window_bounds = array<i64: 1, 128>}, {transform_indices = @transform_3, window_bounds = array<i64: 512, 128>}]} {
    %c0_i32 = arith.constant 0 : i32
    %0 = arith.cmpi eq, %arg1, %c0_i32 : i32
    %1 = arith.extui %0 : i1 to i32
    %c0_i32_0 = arith.constant 0 : i32
    %2 = arith.cmpi ne, %1, %c0_i32_0 : i32
    scf.if %2 {
      %cst_10 = arith.constant 0.000000e+00 : f32
      %12 = vector.broadcast %cst_10 : f32 to vector<512x128xf32>
      %c0_11 = arith.constant 0 : index
      %c0_12 = arith.constant 0 : index
      %13 = vector.load %arg6[%c0_11, %c0_12] : memref<512x128xf32, #tpu.memory_space<vmem>>, vector<512x128xf32>
      tpu.vector_store %arg6[%c0_11, %c0_12], %12 {strides = array<i32>} : memref<512x128xf32, #tpu.memory_space<vmem>>, vector<512x128xf32>,
    } else {
    }
    %c0 = arith.constant 0 : index
    %c0_1 = arith.constant 0 : index
    %3 = vector.load %arg6[%c0, %c0_1] : memref<512x128xf32, #tpu.memory_space<vmem>>, vector<512x128xf32>
    %c0_2 = arith.constant 0 : index
    %c0_3 = arith.constant 0 : index
    %4 = vector.load %arg2[%c0_2, %c0_3] : memref<512x128xf32, #tpu.memory_space<vmem>>, vector<512x128xf32>
    %c0_4 = arith.constant 0 : index
    %c0_5 = arith.constant 0 : index
    %5 = vector.load %arg3[%c0_4, %c0_5] : memref<128x128xf32, #tpu.memory_space<vmem>>, vector<128x128xf32>
    %cst = arith.constant dense<0.000000e+00> : vector<512x128xf32>
    %6 = tpu.matmul %4, %5, %cst {dimension_numbers = #tpu.dot_dimension_numbers<[1], [0], [0], [1], [0, 0, 1, 1], [], []>} : vector<512x128xf32>, vector<128x128xf32>, vector<512x128xf32> -> vector<512x128xf32>
    %7 = arith.addf %3, %6 : vector<512x128xf32>
    %c0_6 = arith.constant 0 : index
    %c0_7 = arith.constant 0 : index
    %8 = vector.load %arg6[%c0_6, %c0_7] : memref<512x128xf32, #tpu.memory_space<vmem>>, vector<512x128xf32>
    tpu.vector_store %arg6[%c0_6, %c0_7], %7 {strides = array<i32>} : memref<512x128xf32, #tpu.memory_space<vmem>>, vector<512x128xf32>,
    %c0_i32_8 = arith.constant 0 : i32
    %9 = arith.cmpi eq, %arg1, %c0_i32_8 : i32
    %10 = arith.extui %9 : i1 to i32
    %c0_i32_9 = arith.constant 0 : i32
    %11 = arith.cmpi ne, %10, %c0_i32_9 : i32
    scf.if %11 {
      %c0_10 = arith.constant 0 : index
      %c0_11 = arith.constant 0 : index
      %12 = vector.load %arg6[%c0_10, %c0_11] : memref<512x128xf32, #tpu.memory_space<vmem>>, vector<512x128xf32>
      %c0_12 = arith.constant 0 : index
      %c0_13 = arith.constant 0 : index
      %13 = vector.load %arg4[%c0_12, %c0_13] : memref<1x128xf32, #tpu.memory_space<vmem>>, vector<1x128xf32>
      %14 = vector.broadcast %13 : vector<1x128xf32> to vector<512x128xf32>
      %15 = arith.addf %12, %14 : vector<512x128xf32>
      %c0_14 = arith.constant 0 : index
      %c0_15 = arith.constant 0 : index
      %16 = vector.load %arg5[%c0_14, %c0_15] : memref<512x128xf32, #tpu.memory_space<vmem>>, vector<512x128xf32>
      tpu.vector_store %arg5[%c0_14, %c0_15], %15 {strides = array<i32>} : memref<512x128xf32, #tpu.memory_space<vmem>>, vector<512x128xf32>,
    } else {
    }
    return
  }
  func.func @transform_0(%arg0: i32, %arg1: i32) -> (i32, i32) {
    %c0_i32 = arith.constant 0 : i32
    return %arg0, %arg1 : i32, i32
  }
  func.func @transform_1(%arg0: i32, %arg1: i32) -> (i32, i32) {
    %c0_i32 = arith.constant 0 : i32
    %c0_i32_0 = arith.constant 0 : i32
    return %arg1, %c0_i32 : i32, i32
  }
  func.func @transform_2(%arg0: i32, %arg1: i32) -> (i32, i32) {
    %c0_i32 = arith.constant 0 : i32
    %c0_i32_0 = arith.constant 0 : i32
    %c0_i32_1 = arith.constant 0 : i32
    return %c0_i32, %c0_i32_0 : i32, i32
  }
  func.func @transform_3(%arg0: i32, %arg1: i32) -> (i32, i32) {
    %c0_i32 = arith.constant 0 : i32
    %c0_i32_0 = arith.constant 0 : i32
    return %arg0, %c0_i32 : i32, i32
  }
}

</mosaic_0001>

<llo_original>
// kernel: conv3d_same.1
$region0: #{conv3d_same.1}
  #allocation0 [shape = 'u32[]', space=smem, size = 0x4, offset = 0x4, fixed_abs, tag = 'smem constant byte address 0x4 - core index']
  #allocation1 [shape = 'u32[72,128]{1,0:T(1,128)}', space=vmem, size = 0x9000, scoped, tag = 'internal scratch']
  #allocation2 [shape = 'f32[512,128]{1,0:T(8,128)}', space=vmem, size = 0x40000, scoped, tag = 'scratch operand']
  %s0 = inlined_call_operand.vmem [shape: f32[1024,128], index: 0, kind: input, shape index: {}]
  %s1 = inlined_call_operand.vmem [shape: f32[128,128], index: 1, kind: input, shape index: {}]
  %s2 = inlined_call_operand.vmem [shape: f32[1,128], index: 2, kind: input, shape index: {}]
  %s3 = inlined_call_operand.vmem [shape: f32[1024,128], index: 3, kind: output, shape index: {}]
  %s4 = sld [smem:[#allocation0]]
  $region53: #{conv3d_same.1} parent=0
    _
  %s6 = ssub.s32 1, %s4
  %s7 = scalar_select 0, %s6, %s4
  loop: start=0, step=1, limit=4
  $region2: #{conv3d_same.1} parent=0 // loop_pre_header
    _
  $region3: #{conv3d_same.1} parent=0 // loop_header
    %s9 = sphi 0, %s13
    %p10 = scmp.ge.s32.totalorder %s9, 4
    %s16 = sphi 0, %s28
    %s17 = sphi 0, %s24
    %s18 = sphi 0, %s16
    %s19 = sphi 0, %s17
    %s20 = sphi 0, %s18
    %s21 = sphi 0, %s19
    %s33 = sphi 0, %s35
    %s36 = sphi 0, %s33
    %s37 = sphi 0, %s36
    %s53 = sphi 0, %s37
    %s59 = sphi 0, %s61
    %s62 = sphi 0, %s59
    %s63 = sphi 0, %s62
    %s79 = sphi 0, %s63
    %s83 = sphi 0, %s83
    %s85 = sphi 0, %s83
    %s86 = sphi 0, %s85
    %s100 = sphi 0, %s86
    %s106 = sphi 0, %s108
    %s109 = sphi 0, %s106
    %s110 = sphi 0, %s109
    %s126 = sphi 0, %s110
  $region4: #{conv3d_same.1} parent=0 // loop_header_branch
    %12 = sbr.rel (%p10) target = $region8
  $region5: #{conv3d_same.1} parent=0 // loop_body
    %s14 = ssub.s32 %s9, 1
    %s15 = ssub.s32 %s9, 2
    %s22 = sadd.s32 1, %s17
    %p23 = scmp.ge.s32.totalorder %s22, 1
    %s24 = scalar_select %p23, 0, %s22
    %s25 = sadd.s32 1, %s16
    %s26 = scalar_select %p23, %s25, %s16
    %p27 = scmp.ge.s32.totalorder %s26, 2
    %s28 = scalar_select %p27, 0, %s26
    %s29 = ssub.s32 %s16, %s28
    %s30 = ssub.s32 %s17, %s24
    %s31 = sor.u32 %s29, %s30
    %p32 = scmp.eq.s32.totalorder %s31, 0
    %s34 = sadd.s32 %s33, 1
    %s35 = scalar_select %p32, %s33, %s34
    %p38 = pneg %p32
    %p39 = scmp.eq.s32.totalorder %s9, 1
    %p40 = por %p38, %p39
    %p41 = scmp.ne.s32.totalorder %s33, %s36
    %p42 = scmp.eq.s32.totalorder %s9, 0
    %p43 = por %p41, %p42
    %p44 = scmp.ne.s32.totalorder %s33, %s36
    %p45 = scmp.eq.s32.totalorder %s14, 1
    %p46 = por %p44, %p45
    %p47 = scmp.ne.s32.totalorder %s36, %s37
    %p48 = scmp.eq.s32.totalorder %s14, 0
    %p49 = por %p47, %p48
    %p50 = scmp.ne.s32.totalorder %s36, %s37
    %p51 = scmp.eq.s32.totalorder %s15, 1
    %p52 = por %p50, %p51
    %p54 = scmp.ne.s32.totalorder %s37, %s53
    %p55 = scmp.eq.s32.totalorder %s15, 0
    %p56 = por %p54, %p55
    %s57 = ssub.s32 %s17, %s24
    %p58 = scmp.eq.s32.totalorder %s57, 0
    %s60 = sadd.s32 %s59, 1
    %s61 = scalar_select %p58, %s59, %s60
    %p64 = pneg %p58
    %p65 = scmp.eq.s32.totalorder %s9, 1
    %p66 = por %p64, %p65
    %p67 = scmp.ne.s32.totalorder %s59, %s62
    %p68 = scmp.eq.s32.totalorder %s9, 0
    %p69 = por %p67, %p68
    %p70 = scmp.ne.s32.totalorder %s59, %s62
    %p71 = scmp.eq.s32.totalorder %s14, 1
    %p72 = por %p70, %p71
    %p73 = scmp.ne.s32.totalorder %s62, %s63
    %p74 = scmp.eq.s32.totalorder %s14, 0
    %p75 = por %p73, %p74
    %p76 = scmp.ne.s32.totalorder %s62, %s63
    %p77 = scmp.eq.s32.totalorder %s15, 1
    %p78 = por %p76, %p77
    %p80 = scmp.ne.s32.totalorder %s63, %s79
    %p81 = scmp.eq.s32.totalorder %s15, 0
    %p82 = por %p80, %p81
    %s84 = sadd.s32 %s83, 1
    %p87 = scmp.eq.s32.totalorder %s9, 1
    %p88 = scmp.ne.s32.totalorder %s83, %s85
    %p89 = scmp.eq.s32.totalorder %s9, 0
    %p90 = por %p88, %p89
    %p91 = scmp.ne.s32.totalorder %s83, %s85
    %p92 = scmp.eq.s32.totalorder %s14, 1
    %p93 = por %p91, %p92
    %p94 = scmp.ne.s32.totalorder %s85, %s86
    %p95 = scmp.eq.s32.totalorder %s14, 0
    %p96 = por %p94, %p95
    %p97 = scmp.ne.s32.totalorder %s85, %s86
    %p98 = scmp.eq.s32.totalorder %s15, 1
    %p99 = por %p97, %p98
    %p101 = scmp.ne.s32.totalorder %s86, %s100
    %p102 = scmp.eq.s32.totalorder %s15, 0
    %p103 = por %p101, %p102
    %s104 = ssub.s32 %s16, %s28
    %p105 = scmp.eq.s32.totalorder %s104, 0
    %s107 = sadd.s32 %s106, 1
    %s108 = scalar_select %p105, %s106, %s107
    %p111 = pneg %p105
    %p112 = scmp.eq.s32.totalorder %s9, 1
    %p113 = por %p111, %p112
    %p114 = scmp.ne.s32.totalorder %s106, %s109
    %p115 = scmp.eq.s32.totalorder %s9, 0
    %p116 = por %p114, %p115
    %p117 = scmp.ne.s32.totalorder %s106, %s109
    %p118 = scmp.eq.s32.totalorder %s14, 1
    %p119 = por %p117, %p118
    %p120 = scmp.ne.s32.totalorder %s109, %s110
    %p121 = scmp.eq.s32.totalorder %s14, 0
    %p122 = por %p120, %p121
    %p123 = scmp.ne.s32.totalorder %s109, %s110
    %p124 = scmp.eq.s32.totalorder %s15, 1
    %p125 = por %p123, %p124
    %p127 = scmp.ne.s32.totalorder %s110, %s126
    %p128 = scmp.eq.s32.totalorder %s15, 0
    %p129 = por %p127, %p128
    %p130 = scmp.le.s32.totalorder 1, %s9
    %p131 = scmp.lt.s32.totalorder %s9, 3
    %p132 = pnand %p130, %p131
    %p133 = pneg %p132
    // Predicated region
    $region9: #{conv3d_same.1} parent=5 // pred_check
      _
    $region10: #{conv3d_same.1} parent=5 // pred_check_branch
      %135 = sbr.rel (%p132) target = $region12
    $region11: #{conv3d_same.1} parent=5 // pred_region
      %s136 = ssub.s32 %s9, 1
      // Predicated region
      $region13: #{conv3d_same.1} parent=11 // pred_check
        %p137 = pneg %p75
      $region14: #{conv3d_same.1} parent=11 // pred_check_branch
        %139 = sbr.rel (%p137) target = $region16
      $region15: #{conv3d_same.1} parent=11 // pred_region
        %s140 = smul.u32 16, %s19
        %p141 = scmp.lt.s32.totalorder %s140, 15
        %s142 = scalar_select %p141, %s140, 15
        %s143 = smul.addr %s142, 8
        %s144 = scalar_lea.vmem %s1, %s143
        %s145 = smul.u32 16, %s19
      $region16: #{conv3d_same.1} parent=11 // pred_fallthru
        _
      // Predicated region
      $region17: #{conv3d_same.1} parent=11 // pred_check
        %p146 = pneg %p96
      $region18: #{conv3d_same.1} parent=11 // pred_check_branch
        %148 = sbr.rel (%p146) target = $region20
      $region19: #{conv3d_same.1} parent=11 // pred_region
        _
      $region20: #{conv3d_same.1} parent=11 // pred_fallthru
        _
    $region12: #{conv3d_same.1} parent=5 // pred_fallthru
      _
    %p149 = scmp.lt.s32.totalorder %s9, 2
    // Predicated region
    $region21: #{conv3d_same.1} parent=5 // pred_check
      %p150 = pneg %p149
    $region22: #{conv3d_same.1} parent=5 // pred_check_branch
      %152 = sbr.rel (%p150) target = $region24
    $region23: #{conv3d_same.1} parent=5 // pred_region
      // Predicated region
      $region25: #{conv3d_same.1} parent=23 // pred_check
        %p153 = pneg %p43
      $region26: #{conv3d_same.1} parent=23 // pred_check_branch
        %155 = sbr.rel (%p153) target = $region28
      $region27: #{conv3d_same.1} parent=23 // pred_region
        %s156 = smul.u32 64, %s16
        %p157 = scmp.lt.s32.totalorder %s156, 127
        %s158 = scalar_select %p157, %s156, 127
        %p159 = scmp.lt.s32.totalorder %s17, 0
        %s160 = scalar_select %p159, %s17, 0
        %s161 = sadd.s32 %s160, %s158
        %s162 = smul.addr %s161, 8
        %s163 = scalar_lea.vmem %s0, %s162
        %s164 = smul.u32 64, %s16
      $region28: #{conv3d_same.1} parent=23 // pred_fallthru
        _
    $region24: #{conv3d_same.1} parent=5 // pred_fallthru
      _
    %p165 = scmp.le.s32.totalorder 1, %s9
    %p166 = scmp.lt.s32.totalorder %s9, 3
    %p167 = pnand %p165, %p166
    %p168 = pneg %p167
    // Predicated region
    $region29: #{conv3d_same.1} parent=5 // pred_check
      _
    $region30: #{conv3d_same.1} parent=5 // pred_check_branch
      %170 = sbr.rel (%p167) target = $region32
    $region31: #{conv3d_same.1} parent=5 // pred_region
      %s171 = ssub.s32 %s9, 1
      %s172 = smul.u32 64, %s18
      %p173 = scmp.lt.s32.totalorder %s172, 127
      %s174 = scalar_select %p173, %s172, 127
      %p175 = scmp.lt.s32.totalorder %s19, 0
      %s176 = scalar_select %p175, %s19, 0
      %s177 = sadd.s32 %s176, %s174
      %s178 = smul.addr %s177, 8
      %s179 = scalar_lea.vmem %s0, %s178
      %p180 = pneg %p49
      %p181 = pneg %p46
      %s182 = smul.u32 16, %s19
      %p183 = scmp.lt.s32.totalorder %s182, 15
      %s184 = scalar_select %p183, %s182, 15
      %s185 = smul.addr %s184, 8
      %s186 = scalar_lea.vmem %s1, %s185
      %p187 = pneg %p75
      %p188 = pneg %p72
      %p189 = pneg %p96
      %p190 = pneg %p93
      %p191 = pneg %p122
      %p192 = pneg %p119
      %s193 = smul.u32 64, %s18
      %p194 = scmp.lt.s32.totalorder %s193, 127
      %s195 = scalar_select %p194, %s193, 127
      %s196 = smul.addr %s195, 8
      %s197 = scalar_lea.vmem %s3, %s196
      %s198 = smul.u32 64, %s18
      %p199 = scmp.lt.s32.totalorder %s198, 127
      %s200 = scalar_select %p199, %s198, 127
      %p201 = scmp.lt.s32.totalorder %s19, 0
      %s202 = scalar_select %p201, %s19, 0
      %s203 = sadd.s32 %s202, %s200
      %s204 = smul.addr %s203, 8
      %s205 = scalar_lea.vmem %s0, %s204
      %s206 = smul.u32 64, %s18
      %s207 = smul.u32 16, %s19
      %p208 = scmp.lt.s32.totalorder %s207, 15
      %s209 = scalar_select %p208, %s207, 15
      %s210 = smul.addr %s209, 8
      %s211 = scalar_lea.vmem %s1, %s210
      %s212 = smul.u32 16, %s19
      %s213 = smul.u32 64, %s18
      %p214 = scmp.lt.s32.totalorder %s213, 127
      %s215 = scalar_select %p214, %s213, 127
      %s216 = smul.addr %s215, 8
      %s217 = scalar_lea.vmem %s3, %s216
      %s218 = smul.u32 64, %s18
      %p219 = scmp.eq.s32.totalorder %s19, 0
      // Predicated region
      $region33: #{conv3d_same.1} parent=31 // pred_check
        %p220 = pneg %p219
      $region34: #{conv3d_same.1} parent=31 // pred_check_branch
        %222 = sbr.rel (%p220) target = $region36
      $region35: #{conv3d_same.1} parent=31 // pred_region
        %223 = vst [vmem:[#allocation2] sm:$0xff] 0.0
        %224 = vst [vmem:[#allocation2 + $0x8] sm:$0xff] 0.0
        %225 = vst [vmem:[#allocation2 + $0x10] sm:$0xff] 0.0
        %226 = vst [vmem:[#allocation2 + $0x18] sm:$0xff] 0.0
        %227 = vst [vmem:[#allocation2 + $0x20] sm:$0xff] 0.0
        %228 = vst [vmem:[#allocation2 + $0x28] sm:$0xff] 0.0
        %229 = vst [vmem:[#allocation2 + $0x30] sm:$0xff] 0.0
        %230 = vst [vmem:[#allocation2 + $0x38] sm:$0xff] 0.0
        %231 = vst [vmem:[#allocation2 + $0x40] sm:$0xff] 0.0
        %232 = vst [vmem:[#allocation2 + $0x48] sm:$0xff] 0.0
        %233 = vst [vmem:[#allocation2 + $0x50] sm:$0xff] 0.0
        %234 = vst [vmem:[#allocation2 + $0x58] sm:$0xff] 0.0
        %235 = vst [vmem:[#allocation2 + $0x60] sm:$0xff] 0.0
        %236 = vst [vmem:[#allocation2 + $0x68] sm:$0xff] 0.0
        %237 = vst [vmem:[#allocation2 + $0x70] sm:$0xff] 0.0
        %238 = vst [vmem:[#allocation2 + $0x78] sm:$0xff] 0.0
        %239 = vst [vmem:[#allocation2 + $0x80] sm:$0xff] 0.0
        %240 = vst [vmem:[#allocation2 + $0x88] sm:$0xff] 0.0
        %241 = vst [vmem:[#allocation2 + $0x90] sm:$0xff] 0.0
        %242 = vst [vmem:[#allocation2 + $0x98] sm:$0xff] 0.0
        %243 = vst [vmem:[#allocation2 + $0xa0] sm:$0xff] 0.0
        %244 = vst [vmem:[#allocation2 + $0xa8] sm:$0xff] 0.0
        %245 = vst [vmem:[#allocation2 + $0xb0] sm:$0xff] 0.0
        %246 = vst [vmem:[#allocation2 + $0xb8] sm:$0xff] 0.0
        %247 = vst [vmem:[#allocation2 + $0xc0] sm:$0xff] 0.0
        %248 = vst [vmem:[#allocation2 + $0xc8] sm:$0xff] 0.0
        %249 = vst [vmem:[#allocation2 + $0xd0] sm:$0xff] 0.0
        %250 = vst [vmem:[#allocation2 + $0xd8] sm:$0xff] 0.0
        %251 = vst [vmem:[#allocation2 + $0xe0] sm:$0xff] 0.0
        %252 = vst [vmem:[#allocation2 + $0xe8] sm:$0xff] 0.0
        %253 = vst [vmem:[#allocation2 + $0xf0] sm:$0xff] 0.0
        %254 = vst [vmem:[#allocation2 + $0xf8] sm:$0xff] 0.0
        %255 = vst [vmem:[#allocation2 + $0x100] sm:$0xff] 0.0
        %256 = vst [vmem:[#allocation2 + $0x108] sm:$0xff] 0.0
        %257 = vst [vmem:[#allocation2 + $0x110] sm:$0xff] 0.0
        %258 = vst [vmem:[#allocation2 + $0x118] sm:$0xff] 0.0
        %259 = vst [vmem:[#allocation2 + $0x120] sm:$0xff] 0.0
        %260 = vst [vmem:[#allocation2 + $0x128] sm:$0xff] 0.0
        %261 = vst [vmem:[#allocation2 + $0x130] sm:$0xff] 0.0
        %262 = vst [vmem:[#allocation2 + $0x138] sm:$0xff] 0.0
        %263 = vst [vmem:[#allocation2 + $0x140] sm:$0xff] 0.0
        %264 = vst [vmem:[#allocation2 + $0x148] sm:$0xff] 0.0
        %265 = vst [vmem:[#allocation2 + $0x150] sm:$0xff] 0.0
        %266 = vst [vmem:[#allocation2 + $0x158] sm:$0xff] 0.0
        %267 = vst [vmem:[#allocation2 + $0x160] sm:$0xff] 0.0
        %268 = vst [vmem:[#allocation2 + $0x168] sm:$0xff] 0.0
        %269 = vst [vmem:[#allocation2 + $0x170] sm:$0xff] 0.0
        %270 = vst [vmem:[#allocation2 + $0x178] sm:$0xff] 0.0
        %271 = vst [vmem:[#allocation2 + $0x180] sm:$0xff] 0.0
        %272 = vst [vmem:[#allocation2 + $0x188] sm:$0xff] 0.0
        %273 = vst [vmem:[#allocation2 + $0x190] sm:$0xff] 0.0
        %274 = vst [vmem:[#allocation2 + $0x198] sm:$0xff] 0.0
        %275 = vst [vmem:[#allocation2 + $0x1a0] sm:$0xff] 0.0
        %276 = vst [vmem:[#allocation2 + $0x1a8] sm:$0xff] 0.0
        %277 = vst [vmem:[#allocation2 + $0x1b0] sm:$0xff] 0.0
        %278 = vst [vmem:[#allocation2 + $0x1b8] sm:$0xff] 0.0
        %279 = vst [vmem:[#allocation2 + $0x1c0] sm:$0xff] 0.0
        %280 = vst [vmem:[#allocation2 + $0x1c8] sm:$0xff] 0.0
        %281 = vst [vmem:[#allocation2 + $0x1d0] sm:$0xff] 0.0
        %282 = vst [vmem:[#allocation2 + $0x1d8] sm:$0xff] 0.0
        %283 = vst [vmem:[#allocation2 + $0x1e0] sm:$0xff] 0.0
        %284 = vst [vmem:[#allocation2 + $0x1e8] sm:$0xff] 0.0
        %285 = vst [vmem:[#allocation2 + $0x1f0] sm:$0xff] 0.0
        %286 = vst [vmem:[#allocation2 + $0x1f8] sm:$0xff] 0.0
      $region36: #{conv3d_same.1} parent=31 // pred_fallthru
        _
      %v287 = vld [vmem:[#allocation2] sm:$0xff]
      %v288 = vld [vmem:[#allocation2 + $0x8] sm:$0xff]
      %v289 = vld [vmem:[#allocation2 + $0x10] sm:$0xff]
      %v290 = vld [vmem:[#allocation2 + $0x18] sm:$0xff]
      %v291 = vld [vmem:[#allocation2 + $0x20] sm:$0xff]
      %v292 = vld [vmem:[#allocation2 + $0x28] sm:$0xff]
      %v293 = vld [vmem:[#allocation2 + $0x30] sm:$0xff]
      %v294 = vld [vmem:[#allocation2 + $0x38] sm:$0xff]
      %v295 = vld [vmem:[#allocation2 + $0x40] sm:$0xff]
      %v296 = vld [vmem:[#allocation2 + $0x48] sm:$0xff]
      %v297 = vld [vmem:[#allocation2 + $0x50] sm:$0xff]
      %v298 = vld [vmem:[#allocation2 + $0x58] sm:$0xff]
      %v299 = vld [vmem:[#allocation2 + $0x60] sm:$0xff]
      %v300 = vld [vmem:[#allocation2 + $0x68] sm:$0xff]
      %v301 = vld [vmem:[#allocation2 + $0x70] sm:$0xff]
      %v302 = vld [vmem:[#allocation2 + $0x78] sm:$0xff]
      %v303 = vld [vmem:[#allocation2 + $0x80] sm:$0xff]
      %v304 = vld [vmem:[#allocation2 + $0x88] sm:$0xff]
      %v305 = vld [vmem:[#allocation2 + $0x90] sm:$0xff]
      %v306 = vld [vmem:[#allocation2 + $0x98] sm:$0xff]
      %v307 = vld [vmem:[#allocation2 + $0xa0] sm:$0xff]
      %v308 = vld [vmem:[#allocation2 + $0xa8] sm:$0xff]
      %v309 = vld [vmem:[#allocation2 + $0xb0] sm:$0xff]
      %v310 = vld [vmem:[#allocation2 + $0xb8] sm:$0xff]
      %v311 = vld [vmem:[#allocation2 + $0xc0] sm:$0xff]
      %v312 = vld [vmem:[#allocation2 + $0xc8] sm:$0xff]
      %v313 = vld [vmem:[#allocation2 + $0xd0] sm:$0xff]
      %v314 = vld [vmem:[#allocation2 + $0xd8] sm:$0xff]
      %v315 = vld [vmem:[#allocation2 + $0xe0] sm:$0xff]
      %v316 = vld [vmem:[#allocation2 + $0xe8] sm:$0xff]
      %v317 = vld [vmem:[#allocation2 + $0xf0] sm:$0xff]
      %v318 = vld [vmem:[#allocation2 + $0xf8] sm:$0xff]
      %v319 = vld [vmem:[#allocation2 + $0x100] sm:$0xff]
      %v320 = vld [vmem:[#allocation2 + $0x108] sm:$0xff]
      %v321 = vld [vmem:[#allocation2 + $0x110] sm:$0xff]
      %v322 = vld [vmem:[#allocation2 + $0x118] sm:$0xff]
      %v323 = vld [vmem:[#allocation2 + $0x120] sm:$0xff]
      %v324 = vld [vmem:[#allocation2 + $0x128] sm:$0xff]
      %v325 = vld [vmem:[#allocation2 + $0x130] sm:$0xff]
      %v326 = vld [vmem:[#allocation2 + $0x138] sm:$0xff]
      %v327 = vld [vmem:[#allocation2 + $0x140] sm:$0xff]
      %v328 = vld [vmem:[#allocation2 + $0x148] sm:$0xff]
      %v329 = vld [vmem:[#allocation2 + $0x150] sm:$0xff]
      %v330 = vld [vmem:[#allocation2 + $0x158] sm:$0xff]
      %v331 = vld [vmem:[#allocation2 + $0x160] sm:$0xff]
      %v332 = vld [vmem:[#allocation2 + $0x168] sm:$0xff]
      %v333 = vld [vmem:[#allocation2 + $0x170] sm:$0xff]
      %v334 = vld [vmem:[#allocation2 + $0x178] sm:$0xff]
      %v335 = vld [vmem:[#allocation2 + $0x180] sm:$0xff]
      %v336 = vld [vmem:[#allocation2 + $0x188] sm:$0xff]
      %v337 = vld [vmem:[#allocation2 + $0x190] sm:$0xff]
      %v338 = vld [vmem:[#allocation2 + $0x198] sm:$0xff]
      %v339 = vld [vmem:[#allocation2 + $0x1a0] sm:$0xff]
      %v340 = vld [vmem:[#allocation2 + $0x1a8] sm:$0xff]
      %v341 = vld [vmem:[#allocation2 + $0x1b0] sm:$0xff]
      %v342 = vld [vmem:[#allocation2 + $0x1b8] sm:$0xff]
      %v343 = vld [vmem:[#allocation2 + $0x1c0] sm:$0xff]
      %v344 = vld [vmem:[#allocation2 + $0x1c8] sm:$0xff]
      %v345 = vld [vmem:[#allocation2 + $0x1d0] sm:$0xff]
      %v346 = vld [vmem:[#allocation2 + $0x1d8] sm:$0xff]
      %v347 = vld [vmem:[#allocation2 + $0x1e0] sm:$0xff]
      %v348 = vld [vmem:[#allocation2 + $0x1e8] sm:$0xff]
      %v349 = vld [vmem:[#allocation2 + $0x1f0] sm:$0xff]
      %v350 = vld [vmem:[#allocation2 + $0x1f8] sm:$0xff]
      %v351 = vld [vmem:[%s205] sm:$0xff]
      %v352 = vld [vmem:[%s205 + $0x8] sm:$0xff]
      %v353 = vld [vmem:[%s205 + $0x10] sm:$0xff]
      %v354 = vld [vmem:[%s205 + $0x18] sm:$0xff]
      %v355 = vld [vmem:[%s205 + $0x20] sm:$0xff]
      %v356 = vld [vmem:[%s205 + $0x28] sm:$0xff]
      %v357 = vld [vmem:[%s205 + $0x30] sm:$0xff]
      %v358 = vld [vmem:[%s205 + $0x38] sm:$0xff]
      %v359 = vld [vmem:[%s205 + $0x40] sm:$0xff]
      %v360 = vld [vmem:[%s205 + $0x48] sm:$0xff]
      %v361 = vld [vmem:[%s205 + $0x50] sm:$0xff]
      %v362 = vld [vmem:[%s205 + $0x58] sm:$0xff]
      %v363 = vld [vmem:[%s205 + $0x60] sm:$0xff]
      %v364 = vld [vmem:[%s205 + $0x68] sm:$0xff]
      %v365 = vld [vmem:[%s205 + $0x70] sm:$0xff]
      %v366 = vld [vmem:[%s205 + $0x78] sm:$0xff]
      %v367 = vld [vmem:[%s205 + $0x80] sm:$0xff]
      %v368 = vld [vmem:[%s205 + $0x88] sm:$0xff]
      %v369 = vld [vmem:[%s205 + $0x90] sm:$0xff]
      %v370 = vld [vmem:[%s205 + $0x98] sm:$0xff]
      %v371 = vld [vmem:[%s205 + $0xa0] sm:$0xff]
      %v372 = vld [vmem:[%s205 + $0xa8] sm:$0xff]
      %v373 = vld [vmem:[%s205 + $0xb0] sm:$0xff]
      %v374 = vld [vmem:[%s205 + $0xb8] sm:$0xff]
      %v375 = vld [vmem:[%s205 + $0xc0] sm:$0xff]
      %v376 = vld [vmem:[%s205 + $0xc8] sm:$0xff]
      %v377 = vld [vmem:[%s205 + $0xd0] sm:$0xff]
      %v378 = vld [vmem:[%s205 + $0xd8] sm:$0xff]
      %v379 = vld [vmem:[%s205 + $0xe0] sm:$0xff]
      %v380 = vld [vmem:[%s205 + $0xe8] sm:$0xff]
      %v381 = vld [vmem:[%s205 + $0xf0] sm:$0xff]
      %v382 = vld [vmem:[%s205 + $0xf8] sm:$0xff]
      %v383 = vld [vmem:[%s205 + $0x100] sm:$0xff]
      %v384 = vld [vmem:[%s205 + $0x108] sm:$0xff]
      %v385 = vld [vmem:[%s205 + $0x110] sm:$0xff]
      %v386 = vld [vmem:[%s205 + $0x118] sm:$0xff]
      %v387 = vld [vmem:[%s205 + $0x120] sm:$0xff]
      %v388 = vld [vmem:[%s205 + $0x128] sm:$0xff]
      %v389 = vld [vmem:[%s205 + $0x130] sm:$0xff]
      %v390 = vld [vmem:[%s205 + $0x138] sm:$0xff]
      %v391 = vld [vmem:[%s205 + $0x140] sm:$0xff]
      %v392 = vld [vmem:[%s205 + $0x148] sm:$0xff]
      %v393 = vld [vmem:[%s205 + $0x150] sm:$0xff]
      %v394 = vld [vmem:[%s205 + $0x158] sm:$0xff]
      %v395 = vld [vmem:[%s205 + $0x160] sm:$0xff]
      %v396 = vld [vmem:[%s205 + $0x168] sm:$0xff]
      %v397 = vld [vmem:[%s205 + $0x170] sm:$0xff]
      %v398 = vld [vmem:[%s205 + $0x178] sm:$0xff]
      %v399 = vld [vmem:[%s205 + $0x180] sm:$0xff]
      %v400 = vld [vmem:[%s205 + $0x188] sm:$0xff]
      %v401 = vld [vmem:[%s205 + $0x190] sm:$0xff]
      %v402 = vld [vmem:[%s205 + $0x198] sm:$0xff]
      %v403 = vld [vmem:[%s205 + $0x1a0] sm:$0xff]
      %v404 = vld [vmem:[%s205 + $0x1a8] sm:$0xff]
      %v405 = vld [vmem:[%s205 + $0x1b0] sm:$0xff]
      %v406 = vld [vmem:[%s205 + $0x1b8] sm:$0xff]
      %v407 = vld [vmem:[%s205 + $0x1c0] sm:$0xff]
      %v408 = vld [vmem:[%s205 + $0x1c8] sm:$0xff]
      %v409 = vld [vmem:[%s205 + $0x1d0] sm:$0xff]
      %v410 = vld [vmem:[%s205 + $0x1d8] sm:$0xff]
      %v411 = vld [vmem:[%s205 + $0x1e0] sm:$0xff]
      %v412 = vld [vmem:[%s205 + $0x1e8] sm:$0xff]
      %v413 = vld [vmem:[%s205 + $0x1f0] sm:$0xff]
      %v414 = vld [vmem:[%s205 + $0x1f8] sm:$0xff]
      %v415 = vld [vmem:[%s211] sm:$0xff]
      %v416 = vld [vmem:[%s211 + $0x8] sm:$0xff]
      %v417 = vld [vmem:[%s211 + $0x10] sm:$0xff]
      %v418 = vld [vmem:[%s211 + $0x18] sm:$0xff]
      %v419 = vld [vmem:[%s211 + $0x20] sm:$0xff]
      %v420 = vld [vmem:[%s211 + $0x28] sm:$0xff]
      %v421 = vld [vmem:[%s211 + $0x30] sm:$0xff]
      %v422 = vld [vmem:[%s211 + $0x38] sm:$0xff]
      %v423 = vld [vmem:[%s211 + $0x40] sm:$0xff]
      %v424 = vld [vmem:[%s211 + $0x48] sm:$0xff]
      %v425 = vld [vmem:[%s211 + $0x50] sm:$0xff]
      %v426 = vld [vmem:[%s211 + $0x58] sm:$0xff]
      %v427 = vld [vmem:[%s211 + $0x60] sm:$0xff]
      %v428 = vld [vmem:[%s211 + $0x68] sm:$0xff]
      %v429 = vld [vmem:[%s211 + $0x70] sm:$0xff]
      %v430 = vld [vmem:[%s211 + $0x78] sm:$0xff]
      %431 = vmatpush.msra.mxu0 %v430
      %432 = vmatpush.msra.mxu0 %v429
      %433 = vmatpush.msra.mxu0 %v428
      %434 = vmatpush.msra.mxu0 %v427
      %435 = vmatpush.msra.mxu0 %v426
      %436 = vmatpush.msra.mxu0 %v425
      %437 = vmatpush.msra.mxu0 %v424
      %438 = vmatpush.msra.mxu0 %v423
      %439 = vmatpush.msra.mxu0 %v422
      %440 = vmatpush.msra.mxu0 %v421
      %441 = vmatpush.msra.mxu0 %v420
      %442 = vmatpush.msra.mxu0 %v419
      %443 = vmatpush.msra.mxu0 %v418
      %444 = vmatpush.msra.mxu0 %v417
      %445 = vmatpush.msra.mxu0 %v416
      %446 = vmatpush.msra.mxu0 %v415
      %447 = vmatmul.f32.gmra.mxu0 %v351
      %v448 = vpop.f32.mrf.mxu0
      %v449 = vadd.f32 0.0, %v448
      %450 = vmatmul.f32.gmra.mxu0 %v352
      %v451 = vpop.f32.mrf.mxu0
      %v452 = vadd.f32 0.0, %v451
      %453 = vmatmul.f32.gmra.mxu0 %v353
      %v454 = vpop.f32.mrf.mxu0
      %v455 = vadd.f32 0.0, %v454
      %456 = vmatmul.f32.gmra.mxu0 %v354
      %v457 = vpop.f32.mrf.mxu0
      %v458 = vadd.f32 0.0, %v457
      %459 = vmatmul.f32.gmra.mxu0 %v355
      %v460 = vpop.f32.mrf.mxu0
      %v461 = vadd.f32 0.0, %v460
      %462 = vmatmul.f32.gmra.mxu0 %v356
      %v463 = vpop.f32.mrf.mxu0
      %v464 = vadd.f32 0.0, %v463
      %465 = vmatmul.f32.gmra.mxu0 %v357
      %v466 = vpop.f32.mrf.mxu0
      %v467 = vadd.f32 0.0, %v466
      %468 = vmatmul.f32.gmra.mxu0 %v358
      %v469 = vpop.f32.mrf.mxu0
      %v470 = vadd.f32 0.0, %v469
      %471 = vmatmul.f32.gmra.mxu0 %v359
      %v472 = vpop.f32.mrf.mxu0
      %v473 = vadd.f32 0.0, %v472
      %474 = vmatmul.f32.gmra.mxu0 %v360
      %v475 = vpop.f32.mrf.mxu0
      %v476 = vadd.f32 0.0, %v475
      %477 = vmatmul.f32.gmra.mxu0 %v361
      %v478 = vpop.f32.mrf.mxu0
      %v479 = vadd.f32 0.0, %v478
      %480 = vmatmul.f32.gmra.mxu0 %v362
      %v481 = vpop.f32.mrf.mxu0
      %v482 = vadd.f32 0.0, %v481
      %483 = vmatmul.f32.gmra.mxu0 %v363
      %v484 = vpop.f32.mrf.mxu0
      %v485 = vadd.f32 0.0, %v484
      %486 = vmatmul.f32.gmra.mxu0 %v364
      %v487 = vpop.f32.mrf.mxu0
      %v488 = vadd.f32 0.0, %v487
      %489 = vmatmul.f32.gmra.mxu0 %v365
      %v490 = vpop.f32.mrf.mxu0
      %v491 = vadd.f32 0.0, %v490
      %492 = vmatmul.f32.gmra.mxu0 %v366
      %v493 = vpop.f32.mrf.mxu0
      %v494 = vadd.f32 0.0, %v493
      %495 = vmatmul.f32.gmra.mxu0 %v367
      %v496 = vpop.f32.mrf.mxu0
      %v497 = vadd.f32 0.0, %v496
      %498 = vmatmul.f32.gmra.mxu0 %v368
      %v499 = vpop.f32.mrf.mxu0
      %v500 = vadd.f32 0.0, %v499
      %501 = vmatmul.f32.gmra.mxu0 %v369
      %v502 = vpop.f32.mrf.mxu0
      %v503 = vadd.f32 0.0, %v502
      %504 = vmatmul.f32.gmra.mxu0 %v370
      %v505 = vpop.f32.mrf.mxu0
      %v506 = vadd.f32 0.0, %v505
      %507 = vmatmul.f32.gmra.mxu0 %v371
      %v508 = vpop.f32.mrf.mxu0
      %v509 = vadd.f32 0.0, %v508
      %510 = vmatmul.f32.gmra.mxu0 %v372
      %v511 = vpop.f32.mrf.mxu0
      %v512 = vadd.f32 0.0, %v511
      %513 = vmatmul.f32.gmra.mxu0 %v373
      %v514 = vpop.f32.mrf.mxu0
      %v515 = vadd.f32 0.0, %v514
      %516 = vmatmul.f32.gmra.mxu0 %v374
      %v517 = vpop.f32.mrf.mxu0
      %v518 = vadd.f32 0.0, %v517
      %519 = vmatmul.f32.gmra.mxu0 %v375
      %v520 = vpop.f32.mrf.mxu0
      %v521 = vadd.f32 0.0, %v520
      %522 = vmatmul.f32.gmra.mxu0 %v376
      %v523 = vpop.f32.mrf.mxu0
      %v524 = vadd.f32 0.0, %v523
      %525 = vmatmul.f32.gmra.mxu0 %v377
      %v526 = vpop.f32.mrf.mxu0
      %v527 = vadd.f32 0.0, %v526
      %528 = vmatmul.f32.gmra.mxu0 %v378
      %v529 = vpop.f32.mrf.mxu0
      %v530 = vadd.f32 0.0, %v529
      %531 = vmatmul.f32.gmra.mxu0 %v379
      %v532 = vpop.f32.mrf.mxu0
      %v533 = vadd.f32 0.0, %v532
      %534 = vmatmul.f32.gmra.mxu0 %v380
      %v535 = vpop.f32.mrf.mxu0
      %v536 = vadd.f32 0.0, %v535
      %537 = vmatmul.f32.gmra.mxu0 %v381
      %v538 = vpop.f32.mrf.mxu0
      %v539 = vadd.f32 0.0, %v538
      %540 = vmatmul.f32.gmra.mxu0 %v382
      %v541 = vpop.f32.mrf.mxu0
      %v542 = vadd.f32 0.0, %v541
      %543 = vmatmul.f32.gmra.mxu0 %v383
      %v544 = vpop.f32.mrf.mxu0
      %v545 = vadd.f32 0.0, %v544
      %546 = vmatmul.f32.gmra.mxu0 %v384
      %v547 = vpop.f32.mrf.mxu0
      %v548 = vadd.f32 0.0, %v547
      %549 = vmatmul.f32.gmra.mxu0 %v385
      %v550 = vpop.f32.mrf.mxu0
      %v551 = vadd.f32 0.0, %v550
      %552 = vmatmul.f32.gmra.mxu0 %v386
      %v553 = vpop.f32.mrf.mxu0
      %v554 = vadd.f32 0.0, %v553
      %555 = vmatmul.f32.gmra.mxu0 %v387
      %v556 = vpop.f32.mrf.mxu0
      %v557 = vadd.f32 0.0, %v556
      %558 = vmatmul.f32.gmra.mxu0 %v388
      %v559 = vpop.f32.mrf.mxu0
      %v560 = vadd.f32 0.0, %v559
      %561 = vmatmul.f32.gmra.mxu0 %v389
      %v562 = vpop.f32.mrf.mxu0
      %v563 = vadd.f32 0.0, %v562
      %564 = vmatmul.f32.gmra.mxu0 %v390
      %v565 = vpop.f32.mrf.mxu0
      %v566 = vadd.f32 0.0, %v565
      %567 = vmatmul.f32.gmra.mxu0 %v391
      %v568 = vpop.f32.mrf.mxu0
      %v569 = vadd.f32 0.0, %v568
      %570 = vmatmul.f32.gmra.mxu0 %v392
      %v571 = vpop.f32.mrf.mxu0
      %v572 = vadd.f32 0.0, %v571
      %573 = vmatmul.f32.gmra.mxu0 %v393
      %v574 = vpop.f32.mrf.mxu0
      %v575 = vadd.f32 0.0, %v574
      %576 = vmatmul.f32.gmra.mxu0 %v394
      %v577 = vpop.f32.mrf.mxu0
      %v578 = vadd.f32 0.0, %v577
      %579 = vmatmul.f32.gmra.mxu0 %v395
      %v580 = vpop.f32.mrf.mxu0
      %v581 = vadd.f32 0.0, %v580
      %582 = vmatmul.f32.gmra.mxu0 %v396
      %v583 = vpop.f32.mrf.mxu0
      %v584 = vadd.f32 0.0, %v583
      %585 = vmatmul.f32.gmra.mxu0 %v397
      %v586 = vpop.f32.mrf.mxu0
      %v587 = vadd.f32 0.0, %v586
      %588 = vmatmul.f32.gmra.mxu0 %v398
      %v589 = vpop.f32.mrf.mxu0
      %v590 = vadd.f32 0.0, %v589
      %591 = vmatmul.f32.gmra.mxu0 %v399
      %v592 = vpop.f32.mrf.mxu0
      %v593 = vadd.f32 0.0, %v592
      %594 = vmatmul.f32.gmra.mxu0 %v400
      %v595 = vpop.f32.mrf.mxu0
      %v596 = vadd.f32 0.0, %v595
      %597 = vmatmul.f32.gmra.mxu0 %v401
      %v598 = vpop.f32.mrf.mxu0
      %v599 = vadd.f32 0.0, %v598
      %600 = vmatmul.f32.gmra.mxu0 %v402
      %v601 = vpop.f32.mrf.mxu0
      %v602 = vadd.f32 0.0, %v601
      %603 = vmatmul.f32.gmra.mxu0 %v403
      %v604 = vpop.f32.mrf.mxu0
      %v605 = vadd.f32 0.0, %v604
      %606 = vmatmul.f32.gmra.mxu0 %v404
      %v607 = vpop.f32.mrf.mxu0
      %v608 = vadd.f32 0.0, %v607
      %609 = vmatmul.f32.gmra.mxu0 %v405
      %v610 = vpop.f32.mrf.mxu0
      %v611 = vadd.f32 0.0, %v610
      %612 = vmatmul.f32.gmra.mxu0 %v406
      %v613 = vpop.f32.mrf.mxu0
      %v614 = vadd.f32 0.0, %v613
      %615 = vmatmul.f32.gmra.mxu0 %v407
      %v616 = vpop.f32.mrf.mxu0
      %v617 = vadd.f32 0.0, %v616
      %618 = vmatmul.f32.gmra.mxu0 %v408
      %v619 = vpop.f32.mrf.mxu0
      %v620 = vadd.f32 0.0, %v619
      %621 = vmatmul.f32.gmra.mxu0 %v409
      %v622 = vpop.f32.mrf.mxu0
      %v623 = vadd.f32 0.0, %v622
      %624 = vmatmul.f32.gmra.mxu0 %v410
      %v625 = vpop.f32.mrf.mxu0
      %v626 = vadd.f32 0.0, %v625
      %627 = vmatmul.f32.gmra.mxu0 %v411
      %v628 = vpop.f32.mrf.mxu0
      %v629 = vadd.f32 0.0, %v628
      %630 = vmatmul.f32.gmra.mxu0 %v412
      %v631 = vpop.f32.mrf.mxu0
      %v632 = vadd.f32 0.0, %v631
      %633 = vmatmul.f32.gmra.mxu0 %v413
      %v634 = vpop.f32.mrf.mxu0
      %v635 = vadd.f32 0.0, %v634
      %636 = vmatmul.f32.gmra.mxu0 %v414
      %v637 = vpop.f32.mrf.mxu0
      %v638 = vadd.f32 0.0, %v637
      %639 = vdwg.mxu0
      %v640 = vadd.f32 %v287, %v449
      %v641 = vadd.f32 %v288, %v452
      %v642 = vadd.f32 %v289, %v455
      %v643 = vadd.f32 %v290, %v458
      %v644 = vadd.f32 %v291, %v461
      %v645 = vadd.f32 %v292, %v464
      %v646 = vadd.f32 %v293, %v467
      %v647 = vadd.f32 %v294, %v470
      %v648 = vadd.f32 %v295, %v473
      %v649 = vadd.f32 %v296, %v476
      %v650 = vadd.f32 %v297, %v479
      %v651 = vadd.f32 %v298, %v482
      %v652 = vadd.f32 %v299, %v485
      %v653 = vadd.f32 %v300, %v488
      %v654 = vadd.f32 %v301, %v491
      %v655 = vadd.f32 %v302, %v494
      %v656 = vadd.f32 %v303, %v497
      %v657 = vadd.f32 %v304, %v500
      %v658 = vadd.f32 %v305, %v503
      %v659 = vadd.f32 %v306, %v506
      %v660 = vadd.f32 %v307, %v509
      %v661 = vadd.f32 %v308, %v512
      %v662 = vadd.f32 %v309, %v515
      %v663 = vadd.f32 %v310, %v518
      %v664 = vadd.f32 %v311, %v521
      %v665 = vadd.f32 %v312, %v524
      %v666 = vadd.f32 %v313, %v527
      %v667 = vadd.f32 %v314, %v530
      %v668 = vadd.f32 %v315, %v533
      %v669 = vadd.f32 %v316, %v536
      %v670 = vadd.f32 %v317, %v539
      %v671 = vadd.f32 %v318, %v542
      %v672 = vadd.f32 %v319, %v545
      %v673 = vadd.f32 %v320, %v548
      %v674 = vadd.f32 %v321, %v551
      %v675 = vadd.f32 %v322, %v554
      %v676 = vadd.f32 %v323, %v557
      %v677 = vadd.f32 %v324, %v560
      %v678 = vadd.f32 %v325, %v563
      %v679 = vadd.f32 %v326, %v566
      %v680 = vadd.f32 %v327, %v569
      %v681 = vadd.f32 %v328, %v572
      %v682 = vadd.f32 %v329, %v575
      %v683 = vadd.f32 %v330, %v578
      %v684 = vadd.f32 %v331, %v581
      %v685 = vadd.f32 %v332, %v584
      %v686 = vadd.f32 %v333, %v587
      %v687 = vadd.f32 %v334, %v590
      %v688 = vadd.f32 %v335, %v593
      %v689 = vadd.f32 %v336, %v596
      %v690 = vadd.f32 %v337, %v599
      %v691 = vadd.f32 %v338, %v602
      %v692 = vadd.f32 %v339, %v605
      %v693 = vadd.f32 %v340, %v608
      %v694 = vadd.f32 %v341, %v611
      %v695 = vadd.f32 %v342, %v614
      %v696 = vadd.f32 %v343, %v617
      %v697 = vadd.f32 %v344, %v620
      %v698 = vadd.f32 %v345, %v623
      %v699 = vadd.f32 %v346, %v626
      %v700 = vadd.f32 %v347, %v629
      %v701 = vadd.f32 %v348, %v632
      %v702 = vadd.f32 %v349, %v635
      %v703 = vadd.f32 %v350, %v638
      %704 = vst [vmem:[#allocation2] sm:$0xff] %v640
      %705 = vst [vmem:[#allocation2 + $0x8] sm:$0xff] %v641
      %706 = vst [vmem:[#allocation2 + $0x10] sm:$0xff] %v642
      %707 = vst [vmem:[#allocation2 + $0x18] sm:$0xff] %v643
      %708 = vst [vmem:[#allocation2 + $0x20] sm:$0xff] %v644
      %709 = vst [vmem:[#allocation2 + $0x28] sm:$0xff] %v645
      %710 = vst [vmem:[#allocation2 + $0x30] sm:$0xff] %v646
      %711 = vst [vmem:[#allocation2 + $0x38] sm:$0xff] %v647
      %712 = vst [vmem:[#allocation2 + $0x40] sm:$0xff] %v648
      %713 = vst [vmem:[#allocation2 + $0x48] sm:$0xff] %v649
      %714 = vst [vmem:[#allocation2 + $0x50] sm:$0xff] %v650
      %715 = vst [vmem:[#allocation2 + $0x58] sm:$0xff] %v651
      %716 = vst [vmem:[#allocation2 + $0x60] sm:$0xff] %v652
      %717 = vst [vmem:[#allocation2 + $0x68] sm:$0xff] %v653
      %718 = vst [vmem:[#allocation2 + $0x70] sm:$0xff] %v654
      %719 = vst [vmem:[#allocation2 + $0x78] sm:$0xff] %v655
      %720 = vst [vmem:[#allocation2 + $0x80] sm:$0xff] %v656
      %721 = vst [vmem:[#allocation2 + $0x88] sm:$0xff] %v657
      %722 = vst [vmem:[#allocation2 + $0x90] sm:$0xff] %v658
      %723 = vst [vmem:[#allocation2 + $0x98] sm:$0xff] %v659
      %724 = vst [vmem:[#allocation2 + $0xa0] sm:$0xff] %v660
      %725 = vst [vmem:[#allocation2 + $0xa8] sm:$0xff] %v661
      %726 = vst [vmem:[#allocation2 + $0xb0] sm:$0xff] %v662
      %727 = vst [vmem:[#allocation2 + $0xb8] sm:$0xff] %v663
      %728 = vst [vmem:[#allocation2 + $0xc0] sm:$0xff] %v664
      %729 = vst [vmem:[#allocation2 + $0xc8] sm:$0xff] %v665
      %730 = vst [vmem:[#allocation2 + $0xd0] sm:$0xff] %v666
      %731 = vst [vmem:[#allocation2 + $0xd8] sm:$0xff] %v667
      %732 = vst [vmem:[#allocation2 + $0xe0] sm:$0xff] %v668
      %733 = vst [vmem:[#allocation2 + $0xe8] sm:$0xff] %v669
      %734 = vst [vmem:[#allocation2 + $0xf0] sm:$0xff] %v670
      %735 = vst [vmem:[#allocation2 + $0xf8] sm:$0xff] %v671
      %736 = vst [vmem:[#allocation2 + $0x100] sm:$0xff] %v672
      %737 = vst [vmem:[#allocation2 + $0x108] sm:$0xff] %v673
      %738 = vst [vmem:[#allocation2 + $0x110] sm:$0xff] %v674
      %739 = vst [vmem:[#allocation2 + $0x118] sm:$0xff] %v675
      %740 = vst [vmem:[#allocation2 + $0x120] sm:$0xff] %v676
      %741 = vst [vmem:[#allocation2 + $0x128] sm:$0xff] %v677
      %742 = vst [vmem:[#allocation2 + $0x130] sm:$0xff] %v678
      %743 = vst [vmem:[#allocation2 + $0x138] sm:$0xff] %v679
      %744 = vst [vmem:[#allocation2 + $0x140] sm:$0xff] %v680
      %745 = vst [vmem:[#allocation2 + $0x148] sm:$0xff] %v681
      %746 = vst [vmem:[#allocation2 + $0x150] sm:$0xff] %v682
      %747 = vst [vmem:[#allocation2 + $0x158] sm:$0xff] %v683
      %748 = vst [vmem:[#allocation2 + $0x160] sm:$0xff] %v684
      %749 = vst [vmem:[#allocation2 + $0x168] sm:$0xff] %v685
      %750 = vst [vmem:[#allocation2 + $0x170] sm:$0xff] %v686
      %751 = vst [vmem:[#allocation2 + $0x178] sm:$0xff] %v687
      %752 = vst [vmem:[#allocation2 + $0x180] sm:$0xff] %v688
      %753 = vst [vmem:[#allocation2 + $0x188] sm:$0xff] %v689
      %754 = vst [vmem:[#allocation2 + $0x190] sm:$0xff] %v690
      %755 = vst [vmem:[#allocation2 + $0x198] sm:$0xff] %v691
      %756 = vst [vmem:[#allocation2 + $0x1a0] sm:$0xff] %v692
      %757 = vst [vmem:[#allocation2 + $0x1a8] sm:$0xff] %v693
      %758 = vst [vmem:[#allocation2 + $0x1b0] sm:$0xff] %v694
      %759 = vst [vmem:[#allocation2 + $0x1b8] sm:$0xff] %v695
      %760 = vst [vmem:[#allocation2 + $0x1c0] sm:$0xff] %v696
      %761 = vst [vmem:[#allocation2 + $0x1c8] sm:$0xff] %v697
      %762 = vst [vmem:[#allocation2 + $0x1d0] sm:$0xff] %v698
      %763 = vst [vmem:[#allocation2 + $0x1d8] sm:$0xff] %v699
      %764 = vst [vmem:[#allocation2 + $0x1e0] sm:$0xff] %v700
      %765 = vst [vmem:[#allocation2 + $0x1e8] sm:$0xff] %v701
      %766 = vst [vmem:[#allocation2 + $0x1f0] sm:$0xff] %v702
      %767 = vst [vmem:[#allocation2 + $0x1f8] sm:$0xff] %v703
      // Predicated region
      $region37: #{conv3d_same.1} parent=31 // pred_check
        %p768 = pneg %p219
      $region38: #{conv3d_same.1} parent=31 // pred_check_branch
        %770 = sbr.rel (%p768) target = $region40
      $region39: #{conv3d_same.1} parent=31 // pred_region
        %v771 = vld [vmem:[#allocation2] sm:$0xff]
        %v772 = vld [vmem:[#allocation2 + $0x8] sm:$0xff]
        %v773 = vld [vmem:[#allocation2 + $0x10] sm:$0xff]
        %v774 = vld [vmem:[#allocation2 + $0x18] sm:$0xff]
        %v775 = vld [vmem:[#allocation2 + $0x20] sm:$0xff]
        %v776 = vld [vmem:[#allocation2 + $0x28] sm:$0xff]
        %v777 = vld [vmem:[#allocation2 + $0x30] sm:$0xff]
        %v778 = vld [vmem:[#allocation2 + $0x38] sm:$0xff]
        %v779 = vld [vmem:[#allocation2 + $0x40] sm:$0xff]
        %v780 = vld [vmem:[#allocation2 + $0x48] sm:$0xff]
        %v781 = vld [vmem:[#allocation2 + $0x50] sm:$0xff]
        %v782 = vld [vmem:[#allocation2 + $0x58] sm:$0xff]
        %v783 = vld [vmem:[#allocation2 + $0x60] sm:$0xff]
        %v784 = vld [vmem:[#allocation2 + $0x68] sm:$0xff]
        %v785 = vld [vmem:[#allocation2 + $0x70] sm:$0xff]
        %v786 = vld [vmem:[#allocation2 + $0x78] sm:$0xff]
        %v787 = vld [vmem:[#allocation2 + $0x80] sm:$0xff]
        %v788 = vld [vmem:[#allocation2 + $0x88] sm:$0xff]
        %v789 = vld [vmem:[#allocation2 + $0x90] sm:$0xff]
        %v790 = vld [vmem:[#allocation2 + $0x98] sm:$0xff]
        %v791 = vld [vmem:[#allocation2 + $0xa0] sm:$0xff]
        %v792 = vld [vmem:[#allocation2 + $0xa8] sm:$0xff]
        %v793 = vld [vmem:[#allocation2 + $0xb0] sm:$0xff]
        %v794 = vld [vmem:[#allocation2 + $0xb8] sm:$0xff]
        %v795 = vld [vmem:[#allocation2 + $0xc0] sm:$0xff]
        %v796 = vld [vmem:[#allocation2 + $0xc8] sm:$0xff]
        %v797 = vld [vmem:[#allocation2 + $0xd0] sm:$0xff]
        %v798 = vld [vmem:[#allocation2 + $0xd8] sm:$0xff]
        %v799 = vld [vmem:[#allocation2 + $0xe0] sm:$0xff]
        %v800 = vld [vmem:[#allocation2 + $0xe8] sm:$0xff]
        %v801 = vld [vmem:[#allocation2 + $0xf0] sm:$0xff]
        %v802 = vld [vmem:[#allocation2 + $0xf8] sm:$0xff]
        %v803 = vld [vmem:[#allocation2 + $0x100] sm:$0xff]
        %v804 = vld [vmem:[#allocation2 + $0x108] sm:$0xff]
        %v805 = vld [vmem:[#allocation2 + $0x110] sm:$0xff]
        %v806 = vld [vmem:[#allocation2 + $0x118] sm:$0xff]
        %v807 = vld [vmem:[#allocation2 + $0x120] sm:$0xff]
        %v808 = vld [vmem:[#allocation2 + $0x128] sm:$0xff]
        %v809 = vld [vmem:[#allocation2 + $0x130] sm:$0xff]
        %v810 = vld [vmem:[#allocation2 + $0x138] sm:$0xff]
        %v811 = vld [vmem:[#allocation2 + $0x140] sm:$0xff]
        %v812 = vld [vmem:[#allocation2 + $0x148] sm:$0xff]
        %v813 = vld [vmem:[#allocation2 + $0x150] sm:$0xff]
        %v814 = vld [vmem:[#allocation2 + $0x158] sm:$0xff]
        %v815 = vld [vmem:[#allocation2 + $0x160] sm:$0xff]
        %v816 = vld [vmem:[#allocation2 + $0x168] sm:$0xff]
        %v817 = vld [vmem:[#allocation2 + $0x170] sm:$0xff]
        %v818 = vld [vmem:[#allocation2 + $0x178] sm:$0xff]
        %v819 = vld [vmem:[#allocation2 + $0x180] sm:$0xff]
        %v820 = vld [vmem:[#allocation2 + $0x188] sm:$0xff]
        %v821 = vld [vmem:[#allocation2 + $0x190] sm:$0xff]
        %v822 = vld [vmem:[#allocation2 + $0x198] sm:$0xff]
        %v823 = vld [vmem:[#allocation2 + $0x1a0] sm:$0xff]
        %v824 = vld [vmem:[#allocation2 + $0x1a8] sm:$0xff]
        %v825 = vld [vmem:[#allocation2 + $0x1b0] sm:$0xff]
        %v826 = vld [vmem:[#allocation2 + $0x1b8] sm:$0xff]
        %v827 = vld [vmem:[#allocation2 + $0x1c0] sm:$0xff]
        %v828 = vld [vmem:[#allocation2 + $0x1c8] sm:$0xff]
        %v829 = vld [vmem:[#allocation2 + $0x1d0] sm:$0xff]
        %v830 = vld [vmem:[#allocation2 + $0x1d8] sm:$0xff]
        %v831 = vld [vmem:[#allocation2 + $0x1e0] sm:$0xff]
        %v832 = vld [vmem:[#allocation2 + $0x1e8] sm:$0xff]
        %v833 = vld [vmem:[#allocation2 + $0x1f0] sm:$0xff]
        %v834 = vld [vmem:[#allocation2 + $0x1f8] sm:$0xff]
        %v835 = vld [vmem:[%s2] sm:$0x1]
        %v837 = vperm.slane %v835, 0
        %v839 = vadd.f32 %v771, %v837
        %v840 = vadd.f32 %v772, %v837
        %v841 = vadd.f32 %v773, %v837
        %v842 = vadd.f32 %v774, %v837
        %v843 = vadd.f32 %v775, %v837
        %v844 = vadd.f32 %v776, %v837
        %v845 = vadd.f32 %v777, %v837
        %v846 = vadd.f32 %v778, %v837
        %v847 = vadd.f32 %v779, %v837
        %v848 = vadd.f32 %v780, %v837
        %v849 = vadd.f32 %v781, %v837
        %v850 = vadd.f32 %v782, %v837
        %v851 = vadd.f32 %v783, %v837
        %v852 = vadd.f32 %v784, %v837
        %v853 = vadd.f32 %v785, %v837
        %v854 = vadd.f32 %v786, %v837
        %v855 = vadd.f32 %v787, %v837
        %v856 = vadd.f32 %v788, %v837
        %v857 = vadd.f32 %v789, %v837
        %v858 = vadd.f32 %v790, %v837
        %v859 = vadd.f32 %v791, %v837
        %v860 = vadd.f32 %v792, %v837
        %v861 = vadd.f32 %v793, %v837
        %v862 = vadd.f32 %v794, %v837
        %v863 = vadd.f32 %v795, %v837
        %v864 = vadd.f32 %v796, %v837
        %v865 = vadd.f32 %v797, %v837
        %v866 = vadd.f32 %v798, %v837
        %v867 = vadd.f32 %v799, %v837
        %v868 = vadd.f32 %v800, %v837
        %v869 = vadd.f32 %v801, %v837
        %v870 = vadd.f32 %v802, %v837
        %v871 = vadd.f32 %v803, %v837
        %v872 = vadd.f32 %v804, %v837
        %v873 = vadd.f32 %v805, %v837
        %v874 = vadd.f32 %v806, %v837
        %v875 = vadd.f32 %v807, %v837
        %v876 = vadd.f32 %v808, %v837
        %v877 = vadd.f32 %v809, %v837
        %v878 = vadd.f32 %v810, %v837
        %v879 = vadd.f32 %v811, %v837
        %v880 = vadd.f32 %v812, %v837
        %v881 = vadd.f32 %v813, %v837
        %v882 = vadd.f32 %v814, %v837
        %v883 = vadd.f32 %v815, %v837
        %v884 = vadd.f32 %v816, %v837
        %v885 = vadd.f32 %v817, %v837
        %v886 = vadd.f32 %v818, %v837
        %v887 = vadd.f32 %v819, %v837
        %v888 = vadd.f32 %v820, %v837
        %v889 = vadd.f32 %v821, %v837
        %v890 = vadd.f32 %v822, %v837
        %v891 = vadd.f32 %v823, %v837
        %v892 = vadd.f32 %v824, %v837
        %v893 = vadd.f32 %v825, %v837
        %v894 = vadd.f32 %v826, %v837
        %v895 = vadd.f32 %v827, %v837
        %v896 = vadd.f32 %v828, %v837
        %v897 = vadd.f32 %v829, %v837
        %v898 = vadd.f32 %v830, %v837
        %v899 = vadd.f32 %v831, %v837
        %v900 = vadd.f32 %v832, %v837
        %v901 = vadd.f32 %v833, %v837
        %v902 = vadd.f32 %v834, %v837
        %903 = vst [vmem:[%s217] sm:$0xff] %v839
        %904 = vst [vmem:[%s217 + $0x8] sm:$0xff] %v840
        %905 = vst [vmem:[%s217 + $0x10] sm:$0xff] %v841
        %906 = vst [vmem:[%s217 + $0x18] sm:$0xff] %v842
        %907 = vst [vmem:[%s217 + $0x20] sm:$0xff] %v843
        %908 = vst [vmem:[%s217 + $0x28] sm:$0xff] %v844
        %909 = vst [vmem:[%s217 + $0x30] sm:$0xff] %v845
        %910 = vst [vmem:[%s217 + $0x38] sm:$0xff] %v846
        %911 = vst [vmem:[%s217 + $0x40] sm:$0xff] %v847
        %912 = vst [vmem:[%s217 + $0x48] sm:$0xff] %v848
        %913 = vst [vmem:[%s217 + $0x50] sm:$0xff] %v849
        %914 = vst [vmem:[%s217 + $0x58] sm:$0xff] %v850
        %915 = vst [vmem:[%s217 + $0x60] sm:$0xff] %v851
        %916 = vst [vmem:[%s217 + $0x68] sm:$0xff] %v852
        %917 = vst [vmem:[%s217 + $0x70] sm:$0xff] %v853
        %918 = vst [vmem:[%s217 + $0x78] sm:$0xff] %v854
        %919 = vst [vmem:[%s217 + $0x80] sm:$0xff] %v855
        %920 = vst [vmem:[%s217 + $0x88] sm:$0xff] %v856
        %921 = vst [vmem:[%s217 + $0x90] sm:$0xff] %v857
        %922 = vst [vmem:[%s217 + $0x98] sm:$0xff] %v858
        %923 = vst [vmem:[%s217 + $0xa0] sm:$0xff] %v859
        %924 = vst [vmem:[%s217 + $0xa8] sm:$0xff] %v860
        %925 = vst [vmem:[%s217 + $0xb0] sm:$0xff] %v861
        %926 = vst [vmem:[%s217 + $0xb8] sm:$0xff] %v862
        %927 = vst [vmem:[%s217 + $0xc0] sm:$0xff] %v863
        %928 = vst [vmem:[%s217 + $0xc8] sm:$0xff] %v864
        %929 = vst [vmem:[%s217 + $0xd0] sm:$0xff] %v865
        %930 = vst [vmem:[%s217 + $0xd8] sm:$0xff] %v866
        %931 = vst [vmem:[%s217 + $0xe0] sm:$0xff] %v867
        %932 = vst [vmem:[%s217 + $0xe8] sm:$0xff] %v868
        %933 = vst [vmem:[%s217 + $0xf0] sm:$0xff] %v869
        %934 = vst [vmem:[%s217 + $0xf8] sm:$0xff] %v870
        %935 = vst [vmem:[%s217 + $0x100] sm:$0xff] %v871
        %936 = vst [vmem:[%s217 + $0x108] sm:$0xff] %v872
        %937 = vst [vmem:[%s217 + $0x110] sm:$0xff] %v873
        %938 = vst [vmem:[%s217 + $0x118] sm:$0xff] %v874
        %939 = vst [vmem:[%s217 + $0x120] sm:$0xff] %v875
        %940 = vst [vmem:[%s217 + $0x128] sm:$0xff] %v876
        %941 = vst [vmem:[%s217 + $0x130] sm:$0xff] %v877
        %942 = vst [vmem:[%s217 + $0x138] sm:$0xff] %v878
        %943 = vst [vmem:[%s217 + $0x140] sm:$0xff] %v879
        %944 = vst [vmem:[%s217 + $0x148] sm:$0xff] %v880
        %945 = vst [vmem:[%s217 + $0x150] sm:$0xff] %v881
        %946 = vst [vmem:[%s217 + $0x158] sm:$0xff] %v882
        %947 = vst [vmem:[%s217 + $0x160] sm:$0xff] %v883
        %948 = vst [vmem:[%s217 + $0x168] sm:$0xff] %v884
        %949 = vst [vmem:[%s217 + $0x170] sm:$0xff] %v885
        %950 = vst [vmem:[%s217 + $0x178] sm:$0xff] %v886
        %951 = vst [vmem:[%s217 + $0x180] sm:$0xff] %v887
        %952 = vst [vmem:[%s217 + $0x188] sm:$0xff] %v888
        %953 = vst [vmem:[%s217 + $0x190] sm:$0xff] %v889
        %954 = vst [vmem:[%s217 + $0x198] sm:$0xff] %v890
        %955 = vst [vmem:[%s217 + $0x1a0] sm:$0xff] %v891
        %956 = vst [vmem:[%s217 + $0x1a8] sm:$0xff] %v892
        %957 = vst [vmem:[%s217 + $0x1b0] sm:$0xff] %v893
        %958 = vst [vmem:[%s217 + $0x1b8] sm:$0xff] %v894
        %959 = vst [vmem:[%s217 + $0x1c0] sm:$0xff] %v895
        %960 = vst [vmem:[%s217 + $0x1c8] sm:$0xff] %v896
        %961 = vst [vmem:[%s217 + $0x1d0] sm:$0xff] %v897
        %962 = vst [vmem:[%s217 + $0x1d8] sm:$0xff] %v898
        %963 = vst [vmem:[%s217 + $0x1e0] sm:$0xff] %v899
        %964 = vst [vmem:[%s217 + $0x1e8] sm:$0xff] %v900
        %965 = vst [vmem:[%s217 + $0x1f0] sm:$0xff] %v901
        %966 = vst [vmem:[%s217 + $0x1f8] sm:$0xff] %v902
      $region40: #{conv3d_same.1} parent=31 // pred_fallthru
        _
      %s967 = smul.u32 64, %s18
      %p968 = scmp.lt.s32.totalorder %s967, 127
      %s969 = scalar_select %p968, %s967, 127
      %s970 = smul.addr %s969, 8
      %s971 = scalar_lea.vmem %s3, %s970
      // Predicated region
      $region41: #{conv3d_same.1} parent=31 // pred_check
        %p972 = pneg %p119
      $region42: #{conv3d_same.1} parent=31 // pred_check_branch
        %974 = sbr.rel (%p972) target = $region44
      $region43: #{conv3d_same.1} parent=31 // pred_region
        %s975 = smul.u32 64, %s18
      $region44: #{conv3d_same.1} parent=31 // pred_fallthru
        _
    $region32: #{conv3d_same.1} parent=5 // pred_fallthru
      _
    %p976 = scmp.le.s32.totalorder 2, %s9
    // Predicated region
    $region45: #{conv3d_same.1} parent=5 // pred_check
      %p977 = pneg %p976
    $region46: #{conv3d_same.1} parent=5 // pred_check_branch
      %979 = sbr.rel (%p977) target = $region48
    $region47: #{conv3d_same.1} parent=5 // pred_region
      %s980 = ssub.s32 %s9, 2
      // Predicated region
      $region49: #{conv3d_same.1} parent=47 // pred_check
        %p981 = pneg %p125
      $region50: #{conv3d_same.1} parent=47 // pred_check_branch
        %983 = sbr.rel (%p981) target = $region52
      $region51: #{conv3d_same.1} parent=47 // pred_region
        %s984 = smul.u32 64, %s20
        %p985 = scmp.lt.s32.totalorder %s984, 127
        %s986 = scalar_select %p985, %s984, 127
        %s987 = smul.addr %s986, 8
        %s988 = scalar_lea.vmem %s3, %s987
      $region52: #{conv3d_same.1} parent=47 // pred_fallthru
        _
    $region48: #{conv3d_same.1} parent=5 // pred_fallthru
      _
  $region6: #{conv3d_same.1} parent=0 // loop_footer
    %s13 = sadd.s32 1, %s9
  $region7: #{conv3d_same.1} parent=0 // loop_footer_branch
    %8 = sbr.rel target = $region3
  $region8: #{conv3d_same.1} parent=0 // loop_exit
    _

</llo_original>
